<compile_context>
chip_gen: v7x
topology: tpu7x:2x2x1
jax: 0.10.0
libtpu: 0.0.40
codegen_flags: <defaults>
</compile_context>

<pallas_src>
import functools

import jax
import jax.numpy as jnp
from jax.experimental import pallas as pl
from jax.experimental.pallas import tpu as pltpu

EPS = 1e-07
_MAX_TILE_HW = 32768  # lanes; bigger tiles stop helping and just eat VMEM.


def _round_up(x, m):
    return ((x + m - 1) // m) * m


def _vmem_capacity_bytes():
    try:
        return int(pltpu.get_tpu_info().vmem_capacity_bytes)
    except Exception:
        return 64 * 1024 * 1024  # conservative (v7x-sized) fallback


def _sublane_pad(c, dtype):
    # channels (second-to-last dim) pad to 8 sublanes x 32-bit packing
    packing = max(1, 4 // jnp.dtype(dtype).itemsize)
    return _round_up(max(int(c), 1), 8 * packing)


def _tile_bytes_per_lane(num_classes, gen_dtype, real_dtype, labels_mode):
    gen_bytes = _sublane_pad(num_classes, gen_dtype) * jnp.dtype(gen_dtype).itemsize
    if labels_mode:
        real_bytes = _sublane_pad(1, real_dtype) * jnp.dtype(real_dtype).itemsize
    else:
        real_bytes = _sublane_pad(num_classes, real_dtype) * jnp.dtype(real_dtype).itemsize
    in_bytes = 2 * (gen_bytes + real_bytes)            # double-buffered pipeline
    temp_bytes = 6 * _round_up(num_classes, 8) * 4     # in-kernel f32 temporaries
    return in_bytes + temp_bytes


def _pick_tile_hw(hw, num_classes, gen_dtype, real_dtype, labels_mode):
    cap = _vmem_capacity_bytes()
    budget = min(cap // 2, 32 * 1024 * 1024)
    per_lane = _tile_bytes_per_lane(num_classes, gen_dtype, real_dtype, labels_mode)
    tile = (budget // per_lane) // 128 * 128
    tile = max(128, min(tile, _MAX_TILE_HW))
    tile = min(tile, _round_up(hw, 128))
    return int(tile)


def _iou_sums_kernel(real_ref, gen_ref, sums_ref, inter_acc, sr_acc, sg_acc, *,
                     num_classes, hw, tile_hw, needs_mask, labels_mode):
    s = pl.program_id(1)
    t = pl.program_id(2)
    ntps = pl.num_programs(2)
    g = s * ntps + t  # global spatial-tile index

    @pl.when(t == 0)
    def _():
        inter_acc[...] = jnp.zeros_like(inter_acc)
        sr_acc[...] = jnp.zeros_like(sr_acc)
        sg_acc[...] = jnp.zeros_like(sg_acc)

    def accumulate(masked):
        gen = gen_ref[0].astype(jnp.float32)                    # (C, T)
        if masked:
            lane = jax.lax.broadcasted_iota(jnp.int32, (1, tile_hw), 1)
            valid = (g * tile_hw + lane) < hw                   # (1, T)
            gen = jnp.where(valid, gen, 0.0)

        # per-pixel softmax over the channel (sublane) axis
        m = jnp.max(gen, axis=0, keepdims=True)                 # (1, T)
        e = jnp.exp(gen - m)                                    # (C, T)
        denom = jnp.sum(e, axis=0, keepdims=True)               # (1, T)
        soft = e / denom                                        # (C, T)
        if masked:
            soft = jnp.where(valid, soft, 0.0)

        if labels_mode:
            lab = real_ref[0].astype(jnp.int32)                 # (1, T)
            cls = jax.lax.broadcasted_iota(jnp.int32, (num_classes, tile_hw), 0)
            onehot = cls == lab                                 # (C, T) bool
            if masked:
                onehot = jnp.logical_and(onehot, valid)
            inter_c = jnp.where(onehot, soft, 0.0)
            real_c = onehot.astype(jnp.float32)
        else:
            real = real_ref[0].astype(jnp.float32)              # (C, T)
            if masked:
                real = jnp.where(valid, real, 0.0)
            inter_c = real * soft
            real_c = real

        inter_acc[...] += jnp.sum(inter_c, axis=1, keepdims=True)  # (C, 1)
        sr_acc[...] += jnp.sum(real_c, axis=1, keepdims=True)      # (C, 1)
        sg_acc[...] += jnp.sum(soft, axis=1, keepdims=True)        # (C, 1)

    if needs_mask:
        nt_full = hw // tile_hw  # number of fully-valid tiles

        @pl.when(g < nt_full)
        def _():
            accumulate(False)

        @pl.when(g >= nt_full)   # tail tile or empty (fully out-of-range) tile
        def _():
            accumulate(True)
    else:
        accumulate(False)

    @pl.when(t == ntps - 1)
    def _():
        sums_ref[0, 0, :, 0:1] = inter_acc[...]
        sums_ref[0, 0, :, 1:2] = sr_acc[...]
        sums_ref[0, 0, :, 2:3] = sg_acc[...]


def _iou_sums(real_flat, gen_flat, *, labels_mode, tile_hw=None):
    """Returns (B, C, 3) f32: [intersection, sum(real), sum(softmax(gen))]."""
    B, C, HW = gen_flat.shape
    if tile_hw is None:
        tile_hw = _pick_tile_hw(HW, C, gen_flat.dtype, real_flat.dtype, labels_mode)
    nt_total = pl.cdiv(HW, tile_hw)
    nsplit = 2 if nt_total >= 2 else 1           # keep both v7x TensorCores busy
    ntps = pl.cdiv(nt_total, nsplit)             # tiles per split
    needs_mask = (HW % tile_hw != 0) or (nsplit * ntps != nt_total)
    last_blk = nt_total - 1

    def in_idx3(b, s, t, ntps=ntps, last=last_blk):
        return (b, 0, jnp.minimum(s * ntps + t, last))

    def lab_idx(b, s, t, ntps=ntps, last=last_blk):
        return (b, 0, jnp.minimum(s * ntps + t, last))

    if labels_mode:
        real_spec = pl.BlockSpec((1, 1, tile_hw), lab_idx)
    else:
        real_spec = pl.BlockSpec((1, C, tile_hw), in_idx3)
    gen_spec = pl.BlockSpec((1, C, tile_hw), in_idx3)
    out_spec = pl.BlockSpec((1, 1, C, 3), lambda b, s, t: (b, s, 0, 0))

    per_lane = _tile_bytes_per_lane(C, gen_flat.dtype, real_flat.dtype, labels_mode)
    cap = _vmem_capacity_bytes()
    vmem_limit = int(min(cap * 3 // 4,
                         max(32 * 1024 * 1024, 2 * per_lane * tile_hw)))

    kernel = functools.partial(
        _iou_sums_kernel, num_classes=C, hw=HW, tile_hw=tile_hw,
        needs_mask=needs_mask, labels_mode=labels_mode)

    sums = pl.pallas_call(
        kernel,
        out_shape=jax.ShapeDtypeStruct((B, nsplit, C, 3), jnp.float32),
        grid_spec=pltpu.PrefetchScalarGridSpec(
            num_scalar_prefetch=0,
            grid=(B, nsplit, ntps),
            in_specs=[real_spec, gen_spec],
            out_specs=out_spec,
            scratch_shapes=[pltpu.VMEM((C, 1), jnp.float32)] * 3,
        ),
        compiler_params=pltpu.CompilerParams(
            dimension_semantics=("parallel", "parallel", "arbitrary"),
            vmem_limit_bytes=vmem_limit,
        ),
    )(real_flat, gen_flat)
    return jnp.sum(sums, axis=1)  # combine the per-core splits -> (B, C, 3)


def iou_per_class(real_result, generated_result, *, epsilon=EPS, tile_hw=None):
    """IOU.forward: real/gen are [B, C, H, W]; returns (B, C) IoU."""
    B, C, H, W = generated_result.shape
    real_flat = real_result.reshape(B, C, H * W)       # no dtype cast (native stream)
    gen_flat = generated_result.reshape(B, C, H * W)
    sums = _iou_sums(real_flat, gen_flat, labels_mode=False, tile_hw=tile_hw)
    inter = sums[..., 0]
    union = sums[..., 1] + sums[..., 2] - inter
    return inter / (union + epsilon)


def iou_per_class_from_labels(labels, generated_result, *, epsilon=EPS, tile_hw=None):
    """Fast path: `labels` is an integer class map [B, H, W] (one-hot argmax)."""
    B, C, H, W = generated_result.shape
    lab_flat = labels.reshape(B, 1, H * W)
    gen_flat = generated_result.reshape(B, C, H * W)
    sums = _iou_sums(lab_flat, gen_flat, labels_mode=True, tile_hw=tile_hw)
    inter = sums[..., 0]
    union = sums[..., 1] + sums[..., 2] - inter
    return inter / (union + epsilon)


def iou_loss(real_result, generated_result, *, epsilon=EPS, tile_hw=None):
    """IOULoss.forward: 1 - mean(per-(batch, class) IoU). Scalar."""
    if real_result.ndim == 3:
        iou = iou_per_class_from_labels(real_result, generated_result,
                                        epsilon=epsilon, tile_hw=tile_hw)
    else:
        iou = iou_per_class(real_result, generated_result,
                            epsilon=epsilon, tile_hw=tile_hw)
    return 1.0 - jnp.mean(iou)


def _reference_iou(real, gen, eps=EPS):
    soft = jax.nn.softmax(gen.astype(jnp.float32), axis=1)
    inter = jnp.sum(real * soft, axis=(2, 3))
    union = jnp.sum(real, axis=(2, 3)) + jnp.sum(soft, axis=(2, 3)) - inter
    return inter / (union + eps)


if __name__ == "__main__":
    key = jax.random.PRNGKey(0)
    k1, k2, k3, k4 = jax.random.split(key, 4)

    # Case 1: canonical small shape, dense one-hot real (module-parity path).
    B, C, H, W = 2, 4, 16, 16
    labels = jax.random.randint(k1, (B, H, W), 0, C)
    real = jax.nn.one_hot(labels, C, axis=1).astype(jnp.float32)   # [B, C, H, W]
    gen = jax.random.normal(k2, (B, C, H, W), dtype=jnp.float32)

    ref_iou = jax.block_until_ready(_reference_iou(real, gen))
    iou = jax.block_until_ready(iou_per_class(real, gen))
    assert jnp.allclose(iou, ref_iou, atol=1e-5), (iou, ref_iou)

    loss = jax.block_until_ready(iou_loss(real, gen))
    ref_loss = 1.0 - jnp.mean(ref_iou)
    assert jnp.allclose(loss, ref_loss, atol=1e-5), (loss, ref_loss)

    # Case 2: label-index fast path (streams ~1/C of the `real` bytes).
    iou_lab = jax.block_until_ready(iou_per_class_from_labels(labels, gen))
    assert jnp.allclose(iou_lab, ref_iou, atol=1e-5), (iou_lab, ref_iou)
    loss_lab = jax.block_until_ready(iou_loss(labels, gen))
    assert jnp.allclose(loss_lab, ref_loss, atol=1e-5), (loss_lab, ref_loss)

    # Case 3: multi-tile spatial reduction + tail masking + 2-way split
    # (HW = 324, tile = 128 -> 2 full tiles + 1 masked tail + 1 empty tile).
    B2, C2, H2, W2 = 2, 4, 18, 18
    labels2 = jax.random.randint(k3, (B2, H2, W2), 0, C2)
    real2 = jax.nn.one_hot(labels2, C2, axis=1).astype(jnp.float32)
    gen2 = jax.random.normal(k4, (B2, C2, H2, W2), dtype=jnp.float32)
    ref_iou2 = jax.block_until_ready(_reference_iou(real2, gen2))
    iou2 = jax.block_until_ready(iou_per_class(real2, gen2, tile_hw=128))
    assert jnp.allclose(iou2, ref_iou2, atol=1e-5), (iou2, ref_iou2)
    iou2_lab = jax.block_until_ready(
        iou_per_class_from_labels(labels2, gen2, tile_hw=128))
    assert jnp.allclose(iou2_lab, ref_iou2, atol=1e-5), (iou2_lab, ref_iou2)

    print("KERNEL_OK")
</pallas_src>

<mosaic_0001>
module attributes {stable_mosaic.version = 11 : i64} {
  func.func @_iou_sums_kernel(%arg0: i32, %arg1: i32, %arg2: i32, %arg3: memref<1x4x256xf32, #tpu.memory_space<vmem>>, %arg4: memref<1x4x256xf32, #tpu.memory_space<vmem>>, %arg5: memref<1x1x4x3xf32, #tpu.memory_space<vmem>>, %arg6: memref<4x1xf32, #tpu.memory_space<vmem>>, %arg7: memref<4x1xf32, #tpu.memory_space<vmem>>, %arg8: memref<4x1xf32, #tpu.memory_space<vmem>>) attributes {dimension_semantics = [#tpu.dimension_semantics<parallel>, #tpu.dimension_semantics<parallel>, #tpu.dimension_semantics<arbitrary>], iteration_bounds = array<i64: 2, 1, 1>, scalar_prefetch = 0 : i64, scratch_operands = 3 : i64, tpu.core_type = #tpu.core_type<tc>, window_params = [{transform_indices = @transform_0, window_bounds = array<i64: 1, 4, 256>}, {transform_indices = @transform_1, window_bounds = array<i64: 1, 4, 256>}, {transform_indices = @transform_2, window_bounds = array<i64: 1, 1, 4, 3>}]} {
    %c0_i32 = arith.constant 0 : i32
    %0 = arith.cmpi eq, %arg2, %c0_i32 : i32
    %1 = arith.extui %0 : i1 to i32
    %c0_i32_0 = arith.constant 0 : i32
    %2 = arith.cmpi ne, %1, %c0_i32_0 : i32
    scf.if %2 {
      %cst_24 = arith.constant 0.000000e+00 : f32
      %35 = vector.broadcast %cst_24 : f32 to vector<4x1xf32>
      %c0_25 = arith.constant 0 : index
      %c0_26 = arith.constant 0 : index
      %36 = vector.load %arg6[%c0_25, %c0_26] : memref<4x1xf32, #tpu.memory_space<vmem>>, vector<4x1xf32>
      tpu.vector_store %arg6[%c0_25, %c0_26], %35 {strides = array<i32>} : memref<4x1xf32, #tpu.memory_space<vmem>>, vector<4x1xf32>,
      %cst_27 = arith.constant 0.000000e+00 : f32
      %37 = vector.broadcast %cst_27 : f32 to vector<4x1xf32>
      %c0_28 = arith.constant 0 : index
      %c0_29 = arith.constant 0 : index
      %38 = vector.load %arg7[%c0_28, %c0_29] : memref<4x1xf32, #tpu.memory_space<vmem>>, vector<4x1xf32>
      tpu.vector_store %arg7[%c0_28, %c0_29], %37 {strides = array<i32>} : memref<4x1xf32, #tpu.memory_space<vmem>>, vector<4x1xf32>,
      %cst_30 = arith.constant 0.000000e+00 : f32
      %39 = vector.broadcast %cst_30 : f32 to vector<4x1xf32>
      %c0_31 = arith.constant 0 : index
      %c0_32 = arith.constant 0 : index
      %40 = vector.load %arg8[%c0_31, %c0_32] : memref<4x1xf32, #tpu.memory_space<vmem>>, vector<4x1xf32>
      tpu.vector_store %arg8[%c0_31, %c0_32], %39 {strides = array<i32>} : memref<4x1xf32, #tpu.memory_space<vmem>>, vector<4x1xf32>,
    } else {
    }
    %c0 = arith.constant 0 : index
    %c0_1 = arith.constant 0 : index
    %c0_2 = arith.constant 0 : index
    %3 = vector.load %arg4[%c0, %c0_1, %c0_2] : memref<1x4x256xf32, #tpu.memory_space<vmem>>, vector<1x4x256xf32>
    %4 = vector.shape_cast %3 : vector<1x4x256xf32> to vector<4x256xf32>
    %cst = arith.constant dense<0xFF800000> : vector<256xf32>
    %5 = vector.multi_reduction <maximumf>, %4, %cst [0] : vector<4x256xf32> to vector<256xf32>
    %6 = vector.shape_cast %5 : vector<256xf32> to vector<1x256xf32>
    %7 = vector.broadcast %6 : vector<1x256xf32> to vector<4x256xf32>
    %8 = arith.subf %4, %7 : vector<4x256xf32>
    %9 = math.exp %8 : vector<4x256xf32>
    %cst_3 = arith.constant dense<0.000000e+00> : vector<256xf32>
    %10 = vector.multi_reduction <add>, %9, %cst_3 [0] : vector<4x256xf32> to vector<256xf32>
    %11 = vector.shape_cast %10 : vector<256xf32> to vector<1x256xf32>
    %12 = vector.broadcast %11 : vector<1x256xf32> to vector<4x256xf32>
    %13 = arith.divf %9, %12 : vector<4x256xf32>
    %c0_4 = arith.constant 0 : index
    %c0_5 = arith.constant 0 : index
    %c0_6 = arith.constant 0 : index
    %14 = vector.load %arg3[%c0_4, %c0_5, %c0_6] : memref<1x4x256xf32, #tpu.memory_space<vmem>>, vector<1x4x256xf32>
    %15 = vector.shape_cast %14 : vector<1x4x256xf32> to vector<4x256xf32>
    %16 = arith.mulf %15, %13 : vector<4x256xf32>
    %c0_7 = arith.constant 0 : index
    %c0_8 = arith.constant 0 : index
    %17 = vector.load %arg6[%c0_7, %c0_8] : memref<4x1xf32, #tpu.memory_space<vmem>>, vector<4x1xf32>
    %cst_9 = arith.constant dense<0.000000e+00> : vector<4xf32>
    %18 = vector.multi_reduction <add>, %16, %cst_9 [1] : vector<4x256xf32> to vector<4xf32>
    %19 = vector.shape_cast %18 : vector<4xf32> to vector<4x1xf32>
    %20 = arith.addf %17, %19 : vector<4x1xf32>
    %c0_10 = arith.constant 0 : index
    %c0_11 = arith.constant 0 : index
    %21 = vector.load %arg6[%c0_10, %c0_11] : memref<4x1xf32, #tpu.memory_space<vmem>>, vector<4x1xf32>
    tpu.vector_store %arg6[%c0_10, %c0_11], %20 {strides = array<i32>} : memref<4x1xf32, #tpu.memory_space<vmem>>, vector<4x1xf32>,
    %c0_12 = arith.constant 0 : index
    %c0_13 = arith.constant 0 : index
    %22 = vector.load %arg7[%c0_12, %c0_13] : memref<4x1xf32, #tpu.memory_space<vmem>>, vector<4x1xf32>
    %cst_14 = arith.constant dense<0.000000e+00> : vector<4xf32>
    %23 = vector.multi_reduction <add>, %15, %cst_14 [1] : vector<4x256xf32> to vector<4xf32>
    %24 = vector.shape_cast %23 : vector<4xf32> to vector<4x1xf32>
    %25 = arith.addf %22, %24 : vector<4x1xf32>
    %c0_15 = arith.constant 0 : index
    %c0_16 = arith.constant 0 : index
    %26 = vector.load %arg7[%c0_15, %c0_16] : memref<4x1xf32, #tpu.memory_space<vmem>>, vector<4x1xf32>
    tpu.vector_store %arg7[%c0_15, %c0_16], %25 {strides = array<i32>} : memref<4x1xf32, #tpu.memory_space<vmem>>, vector<4x1xf32>,
    %c0_17 = arith.constant 0 : index
    %c0_18 = arith.constant 0 : index
    %27 = vector.load %arg8[%c0_17, %c0_18] : memref<4x1xf32, #tpu.memory_space<vmem>>, vector<4x1xf32>
    %cst_19 = arith.constant dense<0.000000e+00> : vector<4xf32>
    %28 = vector.multi_reduction <add>, %13, %cst_19 [1] : vector<4x256xf32> to vector<4xf32>
    %29 = vector.shape_cast %28 : vector<4xf32> to vector<4x1xf32>
    %30 = arith.addf %27, %29 : vector<4x1xf32>
    %c0_20 = arith.constant 0 : index
    %c0_21 = arith.constant 0 : index
    %31 = vector.load %arg8[%c0_20, %c0_21] : memref<4x1xf32, #tpu.memory_space<vmem>>, vector<4x1xf32>
    tpu.vector_store %arg8[%c0_20, %c0_21], %30 {strides = array<i32>} : memref<4x1xf32, #tpu.memory_space<vmem>>, vector<4x1xf32>,
    %c0_i32_22 = arith.constant 0 : i32
    %32 = arith.cmpi eq, %arg2, %c0_i32_22 : i32
    %33 = arith.extui %32 : i1 to i32
    %c0_i32_23 = arith.constant 0 : i32
    %34 = arith.cmpi ne, %33, %c0_i32_23 : i32
    scf.if %34 {
      %c0_24 = arith.constant 0 : index
      %c0_25 = arith.constant 0 : index
      %35 = vector.load %arg6[%c0_24, %c0_25] : memref<4x1xf32, #tpu.memory_space<vmem>>, vector<4x1xf32>
      %c0_26 = arith.constant 0 : index
      %c0_27 = arith.constant 0 : index
      %c0_28 = arith.constant 0 : index
      %c0_29 = arith.constant 0 : index
      %36 = vector.load %arg5[%c0_26, %c0_27, %c0_28, %c0_29] : memref<1x1x4x3xf32, #tpu.memory_space<vmem>>, vector<1x1x4x1xf32>
      %37 = vector.shape_cast %36 : vector<1x1x4x1xf32> to vector<4x1xf32>
      %38 = vector.shape_cast %35 : vector<4x1xf32> to vector<1x1x4x1xf32>
      tpu.vector_store %arg5[%c0_26, %c0_27, %c0_28, %c0_29], %38 {strides = array<i32>} : memref<1x1x4x3xf32, #tpu.memory_space<vmem>>, vector<1x1x4x1xf32>,
      %c0_30 = arith.constant 0 : index
      %c0_31 = arith.constant 0 : index
      %39 = vector.load %arg7[%c0_30, %c0_31] : memref<4x1xf32, #tpu.memory_space<vmem>>, vector<4x1xf32>
      %c0_32 = arith.constant 0 : index
      %c0_33 = arith.constant 0 : index
      %c0_34 = arith.constant 0 : index
      %c1 = arith.constant 1 : index
      %40 = vector.load %arg5[%c0_32, %c0_33, %c0_34, %c1] : memref<1x1x4x3xf32, #tpu.memory_space<vmem>>, vector<1x1x4x1xf32>
      %41 = vector.shape_cast %40 : vector<1x1x4x1xf32> to vector<4x1xf32>
      %42 = vector.shape_cast %39 : vector<4x1xf32> to vector<1x1x4x1xf32>
      tpu.vector_store %arg5[%c0_32, %c0_33, %c0_34, %c1], %42 {strides = array<i32>} : memref<1x1x4x3xf32, #tpu.memory_space<vmem>>, vector<1x1x4x1xf32>,
      %c0_35 = arith.constant 0 : index
      %c0_36 = arith.constant 0 : index
      %43 = vector.load %arg8[%c0_35, %c0_36] : memref<4x1xf32, #tpu.memory_space<vmem>>, vector<4x1xf32>
      %c0_37 = arith.constant 0 : index
      %c0_38 = arith.constant 0 : index
      %c0_39 = arith.constant 0 : index
      %c2 = arith.constant 2 : index
      %44 = vector.load %arg5[%c0_37, %c0_38, %c0_39, %c2] : memref<1x1x4x3xf32, #tpu.memory_space<vmem>>, vector<1x1x4x1xf32>
      %45 = vector.shape_cast %44 : vector<1x1x4x1xf32> to vector<4x1xf32>
      %46 = vector.shape_cast %43 : vector<4x1xf32> to vector<1x1x4x1xf32>
      tpu.vector_store %arg5[%c0_37, %c0_38, %c0_39, %c2], %46 {strides = array<i32>} : memref<1x1x4x3xf32, #tpu.memory_space<vmem>>, vector<1x1x4x1xf32>,
    } else {
    }
    return
  }
  func.func @transform_0(%arg0: i32, %arg1: i32, %arg2: i32) -> (i32, i32, i32) {
    %c1_i32 = arith.constant 1 : i32
    %0 = arith.muli %arg1, %c1_i32 : i32
    %1 = arith.addi %0, %arg2 : i32
    %c0_i32 = arith.constant 0 : i32
    %2 = arith.minsi %1, %c0_i32 : i32
    %c0_i32_0 = arith.constant 0 : i32
    %c0_i32_1 = arith.constant 0 : i32
    return %arg0, %c0_i32_0, %2 : i32, i32, i32
  }
  func.func @transform_1(%arg0: i32, %arg1: i32, %arg2: i32) -> (i32, i32, i32) {
    %c1_i32 = arith.constant 1 : i32
    %0 = arith.muli %arg1, %c1_i32 : i32
    %1 = arith.addi %0, %arg2 : i32
    %c0_i32 = arith.constant 0 : i32
    %2 = arith.minsi %1, %c0_i32 : i32
    %c0_i32_0 = arith.constant 0 : i32
    %c0_i32_1 = arith.constant 0 : i32
    return %arg0, %c0_i32_0, %2 : i32, i32, i32
  }
  func.func @transform_2(%arg0: i32, %arg1: i32, %arg2: i32) -> (i32, i32, i32, i32) {
    %c0_i32 = arith.constant 0 : i32
    %c0_i32_0 = arith.constant 0 : i32
    %c0_i32_1 = arith.constant 0 : i32
    return %arg0, %arg1, %c0_i32, %c0_i32_0 : i32, i32, i32, i32
  }
}

</mosaic_0001>

<llo_original>
// kernel: tpu_custom_call.1
$region0: #{tpu_custom_call.1}
  #allocation0 [shape = 'u32[]', space=smem, size = 0x4, offset = 0x4, fixed_abs, tag = 'smem constant byte address 0x4 - core index']
  #allocation1 [shape = 'u32[144,128]{1,0:T(1,128)}', space=vmem, size = 0x12000, scoped, tag = 'internal scratch']
  #allocation2 [shape = 'f32[4,1]{1,0:T(4,128)}', space=vmem, size = 0x800, scoped, tag = 'scratch operand']
  #allocation3 [shape = 'f32[4,1]{1,0:T(4,128)}', space=vmem, size = 0x800, scoped, tag = 'scratch operand']
  #allocation4 [shape = 'f32[4,1]{1,0:T(4,128)}', space=vmem, size = 0x800, scoped, tag = 'scratch operand']
  %s0 = inlined_call_operand.hbm [shape: f32[2,4,256], index: 0, kind: input, shape index: {}]
  %s1 = inlined_call_operand.hbm [shape: f32[2,4,256], index: 1, kind: input, shape index: {}]
  %s2 = inlined_call_operand.vmem [shape: f32[2,1,4,3], index: 2, kind: output, shape index: {}]
  %s3 = sld [smem:[#allocation0]]
  $region57: #{tpu_custom_call.1} parent=0
    _
  %s5 = ssub.s32 1, %s3
  %s6 = scalar_select 0, %s5, %s3
  $region1: #{tpu_custom_call.1} parent=0
    #allocation5 [shape = 'u8[8192]{0}', space=vmem, size = 0x2000, scoped, tag = 'input window, operand 0']
    #allocation6 [shape = 's32[2]{0}', space=sflag, size = 0x8, scoped, tag = 'scoped memory for tpu_custom_call.1']
    #allocation7 [shape = 'u8[8192]{0}', space=vmem, size = 0x2000, scoped, tag = 'input window, operand 1']
    #allocation8 [shape = 's32[2]{0}', space=sflag, size = 0x8, scoped, tag = 'scoped memory for tpu_custom_call.1']
    %7 = vsyncpa [#allocation6], 0
    %s8 = scalar_lea.sflag [#allocation6], 1
    %9 = vsyncpa %s8, 0
    %10 = vsyncpa [#allocation8], 0
    %s11 = scalar_lea.sflag [#allocation8], 1
    %12 = vsyncpa %s11, 0
    loop: start=0, step=1, limit=4
    $region2: #{tpu_custom_call.1} parent=1 // loop_pre_header
      _
    $region3: #{tpu_custom_call.1} parent=1 // loop_header
      %s14 = sphi 0, %s18
      %p15 = scmp.ge.s32.totalorder %s14, 4
      %s21 = sphi 0, %s40
      %s22 = sphi 0, %s36
      %s23 = sphi 0, %s32
      %s24 = sphi 0, %s21
      %s25 = sphi 0, %s22
      %s26 = sphi 0, %s23
      %s27 = sphi 0, %s24
      %s28 = sphi 0, %s25
      %s29 = sphi 0, %s26
      %s51 = sphi 0, %s53
      %s54 = sphi 0, %s51
      %s55 = sphi 0, %s54
      %s71 = sphi 0, %s55
      %s85 = sphi 0, %s87
      %s88 = sphi 0, %s85
      %s89 = sphi 0, %s88
      %s105 = sphi 0, %s89
      %s113 = sphi 0, %s115
      %s116 = sphi 0, %s113
      %s117 = sphi 0, %s116
      %s133 = sphi 0, %s117
    $region4: #{tpu_custom_call.1} parent=1 // loop_header_branch
      %17 = sbr.rel (%p15) target = $region8
    $region5: #{tpu_custom_call.1} parent=1 // loop_body
      %s19 = ssub.s32 %s14, 1
      %s20 = ssub.s32 %s14, 2
      %s30 = sadd.s32 1, %s23
      %p31 = scmp.ge.s32.totalorder %s30, 1
      %s32 = scalar_select %p31, 0, %s30
      %s33 = sadd.s32 1, %s22
      %s34 = scalar_select %p31, %s33, %s22
      %p35 = scmp.ge.s32.totalorder %s34, 1
      %s36 = scalar_select %p35, 0, %s34
      %s37 = sadd.s32 1, %s21
      %s38 = scalar_select %p35, %s37, %s21
      %p39 = scmp.ge.s32.totalorder %s38, 2
      %s40 = scalar_select %p39, 0, %s38
      %s41 = sadd.s32 %s22, %s23
      %p42 = scmp.lt.s32.totalorder %s41, 0
      %s43 = scalar_select %p42, %s41, 0
      %s44 = sadd.s32 %s36, %s32
      %p45 = scmp.lt.s32.totalorder %s44, 0
      %s46 = scalar_select %p45, %s44, 0
      %s47 = ssub.s32 %s21, %s40
      %s48 = ssub.s32 %s43, %s46
      %s49 = sor.u32 %s47, %s48
      %p50 = scmp.eq.s32.totalorder %s49, 0
      %s52 = sadd.s32 %s51, 1
      %s53 = scalar_select %p50, %s51, %s52
      %p56 = pneg %p50
      %p57 = scmp.eq.s32.totalorder %s14, 1
      %p58 = por %p56, %p57
      %p59 = scmp.ne.s32.totalorder %s51, %s54
      %p60 = scmp.eq.s32.totalorder %s14, 0
      %p61 = por %p59, %p60
      %p62 = scmp.ne.s32.totalorder %s51, %s54
      %p63 = scmp.eq.s32.totalorder %s19, 1
      %p64 = por %p62, %p63
      %p65 = scmp.ne.s32.totalorder %s54, %s55
      %p66 = scmp.eq.s32.totalorder %s19, 0
      %p67 = por %p65, %p66
      %p68 = scmp.ne.s32.totalorder %s54, %s55
      %p69 = scmp.eq.s32.totalorder %s20, 1
      %p70 = por %p68, %p69
      %p72 = scmp.ne.s32.totalorder %s55, %s71
      %p73 = scmp.eq.s32.totalorder %s20, 0
      %p74 = por %p72, %p73
      %s75 = sadd.s32 %s22, %s23
      %p76 = scmp.lt.s32.totalorder %s75, 0
      %s77 = scalar_select %p76, %s75, 0
      %s78 = sadd.s32 %s36, %s32
      %p79 = scmp.lt.s32.totalorder %s78, 0
      %s80 = scalar_select %p79, %s78, 0
      %s81 = ssub.s32 %s21, %s40
      %s82 = ssub.s32 %s77, %s80
      %s83 = sor.u32 %s81, %s82
      %p84 = scmp.eq.s32.totalorder %s83, 0
      %s86 = sadd.s32 %s85, 1
      %s87 = scalar_select %p84, %s85, %s86
      %p90 = pneg %p84
      %p91 = scmp.eq.s32.totalorder %s14, 1
      %p92 = por %p90, %p91
      %p93 = scmp.ne.s32.totalorder %s85, %s88
      %p94 = scmp.eq.s32.totalorder %s14, 0
      %p95 = por %p93, %p94
      %p96 = scmp.ne.s32.totalorder %s85, %s88
      %p97 = scmp.eq.s32.totalorder %s19, 1
      %p98 = por %p96, %p97
      %p99 = scmp.ne.s32.totalorder %s88, %s89
      %p100 = scmp.eq.s32.totalorder %s19, 0
      %p101 = por %p99, %p100
      %p102 = scmp.ne.s32.totalorder %s88, %s89
      %p103 = scmp.eq.s32.totalorder %s20, 1
      %p104 = por %p102, %p103
      %p106 = scmp.ne.s32.totalorder %s89, %s105
      %p107 = scmp.eq.s32.totalorder %s20, 0
      %p108 = por %p106, %p107
      %s109 = ssub.s32 %s21, %s40
      %s110 = ssub.s32 %s22, %s36
      %s111 = sor.u32 %s109, %s110
      %p112 = scmp.eq.s32.totalorder %s111, 0
      %s114 = sadd.s32 %s113, 1
      %s115 = scalar_select %p112, %s113, %s114
      %p118 = pneg %p112
      %p119 = scmp.eq.s32.totalorder %s14, 1
      %p120 = por %p118, %p119
      %p121 = scmp.ne.s32.totalorder %s113, %s116
      %p122 = scmp.eq.s32.totalorder %s14, 0
      %p123 = por %p121, %p122
      %p124 = scmp.ne.s32.totalorder %s113, %s116
      %p125 = scmp.eq.s32.totalorder %s19, 1
      %p126 = por %p124, %p125
      %p127 = scmp.ne.s32.totalorder %s116, %s117
      %p128 = scmp.eq.s32.totalorder %s19, 0
      %p129 = por %p127, %p128
      %p130 = scmp.ne.s32.totalorder %s116, %s117
      %p131 = scmp.eq.s32.totalorder %s20, 1
      %p132 = por %p130, %p131
      %p134 = scmp.ne.s32.totalorder %s117, %s133
      %p135 = scmp.eq.s32.totalorder %s20, 0
      %p136 = por %p134, %p135
      %p137 = scmp.le.s32.totalorder 1, %s14
      %p138 = scmp.lt.s32.totalorder %s14, 3
      %p139 = pnand %p137, %p138
      %p140 = pneg %p139
      // Predicated region
      $region9: #{tpu_custom_call.1} parent=5 // pred_check
        _
      $region10: #{tpu_custom_call.1} parent=5 // pred_check_branch
        %142 = sbr.rel (%p139) target = $region12
      $region11: #{tpu_custom_call.1} parent=5 // pred_region
        %s143 = ssub.s32 %s14, 1
      $region12: #{tpu_custom_call.1} parent=5 // pred_fallthru
        _
      %p144 = scmp.lt.s32.totalorder %s14, 2
      // Predicated region
      $region13: #{tpu_custom_call.1} parent=5 // pred_check
        %p145 = pneg %p144
      $region14: #{tpu_custom_call.1} parent=5 // pred_check_branch
        %147 = sbr.rel (%p145) target = $region16
      $region15: #{tpu_custom_call.1} parent=5 // pred_region
        // Predicated region
        $region17: #{tpu_custom_call.1} parent=15 // pred_check
          %p148 = pneg %p61
        $region18: #{tpu_custom_call.1} parent=15 // pred_check_branch
          %150 = sbr.rel (%p148) target = $region20
        $region19: #{tpu_custom_call.1} parent=15 // pred_region
          %s151 = sand.u32 %s51, 1
          %s152 = scalar_lea.sflag [#allocation6], %s151
          %s153 = sand.u32 %s51, 1
          %s154 = smul.addr %s153, 8
          %s155 = scalar_lea.vmem [#allocation5], %s154
          %s156 = sadd.s32 %s22, %s23
          %p157 = scmp.lt.s32.totalorder %s156, 0
          %s158 = scalar_select %p157, %s156, 0
          %s159 = smul.u32 2, %s158
          %s161 = ssub.s32 128, 128
          %162 = vsyncadd %s152, %s161
          %s163 = smul.addr %s21, 2
          %s164 = sadd.s32 %s159, %s163
          %s165 = smul.addr %s164, 64
          %s166 = scalar_lea.hbm %s0, %s165
          %s168 = sshll.u32 %s155, 4
          %s169 = int_to_ptr.vmem [resolvable:$true] %s168
          %171 = dma.hbm_to_vmem [thread:$0]  %s166, 128, %s169, %s152
        $region20: #{tpu_custom_call.1} parent=15 // pred_fallthru
          _
        // Predicated region
        $region21: #{tpu_custom_call.1} parent=15 // pred_check
          %p172 = pneg %p95
        $region22: #{tpu_custom_call.1} parent=15 // pred_check_branch
          %174 = sbr.rel (%p172) target = $region24
        $region23: #{tpu_custom_call.1} parent=15 // pred_region
          %s175 = sand.u32 %s85, 1
          %s176 = scalar_lea.sflag [#allocation8], %s175
          %s177 = sand.u32 %s85, 1
          %s178 = smul.addr %s177, 8
          %s179 = scalar_lea.vmem [#allocation7], %s178
          %s180 = sadd.s32 %s22, %s23
          %p181 = scmp.lt.s32.totalorder %s180, 0
          %s182 = scalar_select %p181, %s180, 0
          %s183 = smul.u32 2, %s182
          %s185 = ssub.s32 128, 128
          %186 = vsyncadd %s176, %s185
          %s187 = smul.addr %s21, 2
          %s188 = sadd.s32 %s183, %s187
          %s189 = smul.addr %s188, 64
          %s190 = scalar_lea.hbm %s1, %s189
          %s192 = sshll.u32 %s179, 4
          %s193 = int_to_ptr.vmem [resolvable:$true] %s192
          %195 = dma.hbm_to_vmem [thread:$0]  %s190, 128, %s193, %s176
        $region24: #{tpu_custom_call.1} parent=15 // pred_fallthru
          _
      $region16: #{tpu_custom_call.1} parent=5 // pred_fallthru
        _
      %p196 = scmp.le.s32.totalorder 1, %s14
      %p197 = scmp.lt.s32.totalorder %s14, 3
      %p198 = pnand %p196, %p197
      %p199 = pneg %p198
      // Predicated region
      $region25: #{tpu_custom_call.1} parent=5 // pred_check
        _
      $region26: #{tpu_custom_call.1} parent=5 // pred_check_branch
        %201 = sbr.rel (%p198) target = $region28
      $region27: #{tpu_custom_call.1} parent=5 // pred_region
        %s202 = ssub.s32 %s14, 1
        %s203 = sand.u32 %s54, 1
        %s204 = scalar_lea.sflag [#allocation6], %s203
        %s205 = sand.u32 %s54, 1
        %s206 = smul.addr %s205, 8
        %s207 = scalar_lea.vmem [#allocation5], %s206
        // Predicated region
        $region29: #{tpu_custom_call.1} parent=27 // pred_check
          %p208 = pneg %p67
        $region30: #{tpu_custom_call.1} parent=27 // pred_check_branch
          %210 = sbr.rel (%p208) target = $region32
        $region31: #{tpu_custom_call.1} parent=27 // pred_region
          %211 = dma.done %s204, 128
        $region32: #{tpu_custom_call.1} parent=27 // pred_fallthru
          _
        %s212 = sand.u32 %s88, 1
        %s213 = scalar_lea.sflag [#allocation8], %s212
        %s214 = sand.u32 %s88, 1
        %s215 = smul.addr %s214, 8
        %s216 = scalar_lea.vmem [#allocation7], %s215
        // Predicated region
        $region33: #{tpu_custom_call.1} parent=27 // pred_check
          %p217 = pneg %p101
        $region34: #{tpu_custom_call.1} parent=27 // pred_check_branch
          %219 = sbr.rel (%p217) target = $region36
        $region35: #{tpu_custom_call.1} parent=27 // pred_region
          %220 = dma.done %s213, 128
        $region36: #{tpu_custom_call.1} parent=27 // pred_fallthru
          _
        %s221 = sand.u32 %s54, 1
        %s222 = scalar_lea.sflag [#allocation6], %s221
        %s223 = sand.u32 %s54, 1
        %s224 = smul.addr %s223, 8
        %s225 = scalar_lea.vmem [#allocation5], %s224
        %p226 = pneg %p67
        %p227 = pneg %p64
        %s228 = sand.u32 %s88, 1
        %s229 = scalar_lea.sflag [#allocation8], %s228
        %s230 = sand.u32 %s88, 1
        %s231 = smul.addr %s230, 8
        %s232 = scalar_lea.vmem [#allocation7], %s231
        %p233 = pneg %p101
        %p234 = pneg %p98
        %p235 = pneg %p129
        %p236 = pneg %p126
        %p237 = scmp.lt.s32.totalorder %s24, 1
        %s238 = scalar_select %p237, %s24, 1
        %p239 = scmp.lt.s32.totalorder %s25, 0
        %s240 = scalar_select %p239, %s25, 0
        %s241 = sadd.s32 %s240, %s238
        %s242 = smul.addr %s241, 4
        %s243 = scalar_lea.vmem %s2, %s242
        %s244 = sadd.s32 %s25, %s26
        %p245 = scmp.lt.s32.totalorder %s244, 0
        %s246 = scalar_select %p245, %s244, 0
        %s247 = smul.u32 2, %s246
        %s248 = sadd.s32 %s25, %s26
        %p249 = scmp.lt.s32.totalorder %s248, 0
        %s250 = scalar_select %p249, %s248, 0
        %s251 = smul.u32 2, %s250
        %p252 = scmp.lt.s32.totalorder %s24, 1
        %s253 = scalar_select %p252, %s24, 1
        %p254 = scmp.lt.s32.totalorder %s25, 0
        %s255 = scalar_select %p254, %s25, 0
        %s256 = sadd.s32 %s255, %s253
        %s257 = smul.addr %s256, 4
        %s258 = scalar_lea.vmem %s2, %s257
        %p259 = scmp.eq.s32.totalorder %s26, 0
        // Predicated region
        $region37: #{tpu_custom_call.1} parent=27 // pred_check
          %p260 = pneg %p259
        $region38: #{tpu_custom_call.1} parent=27 // pred_check_branch
          %262 = sbr.rel (%p260) target = $region40
        $region39: #{tpu_custom_call.1} parent=27 // pred_region
          %vm263 = vcmask 3072
          %264 = vst.msk [vmem:[#allocation2] sm:$0xf] %vm263, 0.0
          %265 = vst.msk [vmem:[#allocation3] sm:$0xf] %vm263, 0.0
          %266 = vst.msk [vmem:[#allocation4] sm:$0xf] %vm263, 0.0
        $region40: #{tpu_custom_call.1} parent=27 // pred_fallthru
          _
        %v267 = vld [vmem:[%s216] sm:$0xff]
        %v269 = vcombine.high %v267, %v267
        %vm271 = vcmask 1043456
        %v272 = vsel %vm271, %v267, -inf
        %v273 = vrot.slane %v272, 4
        %v274 = vmax.f32 %v272, %v273
        %v275 = vrot.slane %v274, 2
        %v276 = vmax.f32 %v274, %v275
        %v277 = vrot.slane %v276, 1
        %v278 = vmax.f32 %v276, %v277
        %v279 = vsel %vm271, %v269, -inf
        %v280 = vrot.slane %v279, 4
        %v281 = vmax.f32 %v279, %v280
        %v282 = vrot.slane %v281, 2
        %v283 = vmax.f32 %v281, %v282
        %v284 = vrot.slane %v283, 1
        %v285 = vmax.f32 %v283, %v284
        %v288 = vcombine.low %v278, %v285
        %v290 = vsub.f32 %v267, %v288
        %v291 = vmul.f32 %v290, 1.442695
        %v292 = vpow.pop %v291
        %v294 = vcombine.high %v292, %v292
        %v296 = vsel %vm271, %v292, 0.0
        %v297 = vrot.slane %v296, 4
        %v298 = vadd.f32 %v296, %v297
        %v299 = vrot.slane %v298, 2
        %v300 = vadd.f32 %v298, %v299
        %v301 = vrot.slane %v300, 1
        %v302 = vadd.f32 %v300, %v301
        %v303 = vsel %vm271, %v294, 0.0
        %v304 = vrot.slane %v303, 4
        %v305 = vadd.f32 %v303, %v304
        %v306 = vrot.slane %v305, 2
        %v307 = vadd.f32 %v305, %v306
        %v308 = vrot.slane %v307, 1
        %v309 = vadd.f32 %v307, %v308
        %v312 = vcombine.low %v302, %v309
        %v314 = vrcp.pop %v312
        %v315 = vmul.f32 %v292, %v314
        %v316 = vld [vmem:[%s207] sm:$0xff]
        %v317 = vmul.f32 %v316, %v315
        %v318 = vld [vmem:[#allocation2] sm:$0xf]
        %v320 = vcombine.high %v317, %v317
        %v322 = vsel %vm271, %v317, 0.0
        %v323 = vsel %vm271, %v320, 0.0
        %v324 = vadd.f32 %v322, %v323
        %325 = vadd.xlane.f32.xlu0 %v324
        %v326 = vpop.xlane.xlu0 %325
        %v327 = vadd.f32 %v318, %v326
        %vm328 = vcmask 3072
        %329 = vst.msk [vmem:[#allocation2] sm:$0xf] %vm328, %v327
        %v330 = vld [vmem:[#allocation3] sm:$0xf]
        %v332 = vcombine.high %v316, %v316
        %v334 = vsel %vm271, %v316, 0.0
        %v335 = vsel %vm271, %v332, 0.0
        %v336 = vadd.f32 %v334, %v335
        %337 = vadd.xlane.f32.xlu0 %v336
        %v338 = vpop.xlane.xlu0 %337
        %v339 = vadd.f32 %v330, %v338
        %340 = vst.msk [vmem:[#allocation3] sm:$0xf] %vm328, %v339
        %v341 = vld [vmem:[#allocation4] sm:$0xf]
        %v343 = vcombine.high %v315, %v315
        %v345 = vsel %vm271, %v315, 0.0
        %v346 = vsel %vm271, %v343, 0.0
        %v347 = vadd.f32 %v345, %v346
        %348 = vadd.xlane.f32.xlu0 %v347
        %v349 = vpop.xlane.xlu0 %348
        %v350 = vadd.f32 %v341, %v349
        %351 = vst.msk [vmem:[#allocation4] sm:$0xf] %vm328, %v350
        // Predicated region
        $region41: #{tpu_custom_call.1} parent=27 // pred_check
          %p352 = pneg %p259
        $region42: #{tpu_custom_call.1} parent=27 // pred_check_branch
          %354 = sbr.rel (%p352) target = $region44
        $region43: #{tpu_custom_call.1} parent=27 // pred_region
          %v355 = vld [vmem:[#allocation2] sm:$0xf]
          %356 = vst.msk [vmem:[%s258] sm:$0xf] %vm328, %v355
          %v357 = vld [vmem:[#allocation3] sm:$0xf]
          %359 = vrot.lane.b32.xlu0 %v357, 1
          %v360 = vpop.permute.xlu0 %359
          %vm362 = vcmask 11272
          %363 = vst.msk [vmem:[%s258] sm:$0xf] %vm362, %v360
          %v364 = vld [vmem:[#allocation4] sm:$0xf]
          %366 = vrot.lane.b32.xlu0 %v364, 2
          %v367 = vpop.permute.xlu0 %366
          %vm369 = vcmask 19472
          %370 = vst.msk [vmem:[%s258] sm:$0xf] %vm369, %v367
        $region44: #{tpu_custom_call.1} parent=27 // pred_fallthru
          _
        %p371 = scmp.lt.s32.totalorder %s24, 1
        %s372 = scalar_select %p371, %s24, 1
        %p373 = scmp.lt.s32.totalorder %s25, 0
        %s374 = scalar_select %p373, %s25, 0
        %s375 = sadd.s32 %s374, %s372
        %s376 = smul.addr %s375, 4
        %s377 = scalar_lea.vmem %s2, %s376
        // Predicated region
        $region45: #{tpu_custom_call.1} parent=27 // pred_check
          %p378 = pneg %p126
        $region46: #{tpu_custom_call.1} parent=27 // pred_check_branch
          %380 = sbr.rel (%p378) target = $region48
        $region47: #{tpu_custom_call.1} parent=27 // pred_region
          _
        $region48: #{tpu_custom_call.1} parent=27 // pred_fallthru
          _
      $region28: #{tpu_custom_call.1} parent=5 // pred_fallthru
        _
      %p381 = scmp.le.s32.totalorder 2, %s14
      // Predicated region
      $region49: #{tpu_custom_call.1} parent=5 // pred_check
        %p382 = pneg %p381
      $region50: #{tpu_custom_call.1} parent=5 // pred_check_branch
        %384 = sbr.rel (%p382) target = $region52
      $region51: #{tpu_custom_call.1} parent=5 // pred_region
        %s385 = ssub.s32 %s14, 2
        // Predicated region
        $region53: #{tpu_custom_call.1} parent=51 // pred_check
          %p386 = pneg %p132
        $region54: #{tpu_custom_call.1} parent=51 // pred_check_branch
          %388 = sbr.rel (%p386) target = $region56
        $region55: #{tpu_custom_call.1} parent=51 // pred_region
          %p389 = scmp.lt.s32.totalorder %s27, 1
          %s390 = scalar_select %p389, %s27, 1
          %p391 = scmp.lt.s32.totalorder %s28, 0
          %s392 = scalar_select %p391, %s28, 0
          %s393 = sadd.s32 %s392, %s390
          %s394 = smul.addr %s393, 4
          %s395 = scalar_lea.vmem %s2, %s394
        $region56: #{tpu_custom_call.1} parent=51 // pred_fallthru
          _
      $region52: #{tpu_custom_call.1} parent=5 // pred_fallthru
        _
    $region6: #{tpu_custom_call.1} parent=1 // loop_footer
      %s18 = sadd.s32 1, %s14
    $region7: #{tpu_custom_call.1} parent=1 // loop_footer_branch
      %13 = sbr.rel target = $region3
    $region8: #{tpu_custom_call.1} parent=1 // loop_exit
      _
    %396 = vsyncpa [#allocation6], 1
    %s397 = scalar_lea.sflag [#allocation6], 1
    %398 = vsyncpa %s397, 1
    %399 = vsyncpa [#allocation8], 1
    %s400 = scalar_lea.sflag [#allocation8], 1
    %401 = vsyncpa %s400, 1

</llo_original>
